<compile_context>
chip_gen: v7x
topology: tpu7x:2x2x1
jax: 0.10.0
libtpu: 0.0.40
codegen_flags: <defaults>
</compile_context>

<pallas_src>
import jax
import jax.numpy as jnp
from jax.experimental import pallas as pl
from jax.experimental.pallas import tpu as pltpu


# ---------------------------------------------------------------------------
# Kernel: whole fused head in one invocation (3 MXU matmuls + 2 ReLUs).
# Layer 3 already contains the dueling combine, so h3 == q.
# ---------------------------------------------------------------------------
def duel_fused_kernel(x_ref, w1_ref, b1_ref, w2_ref, b2_ref, w3_ref, b3_ref,
                      q_ref):
    x = x_ref[...].astype(jnp.bfloat16)

    # Fused layer 1: [adv1 | val1]
    h1 = jnp.dot(x, w1_ref[...], preferred_element_type=jnp.float32) + b1_ref[...]
    h1 = jnp.maximum(h1, 0.0).astype(jnp.bfloat16)

    # Fused (block-diagonal) layer 2: [adv2 | val2]
    h2 = jnp.dot(h1, w2_ref[...], preferred_element_type=jnp.float32) + b2_ref[...]
    h2 = jnp.maximum(h2, 0.0).astype(jnp.bfloat16)

    # Fused layer 3 with the dueling combine folded into the weights:
    #   cols [0:A] = q values, remaining padded lanes = bias-free garbage
    #   (sliced away in the wrapper).  Full-width store stays lane-dense.
    q_ref[...] = (jnp.dot(h2, w3_ref[...], preferred_element_type=jnp.float32)
                  + b3_ref[...]).astype(q_ref.dtype)


# ---------------------------------------------------------------------------
# Parameter construction
# ---------------------------------------------------------------------------
def init_linear(key, in_features, out_features):
    """Mimics nn.Linear init U(-1/sqrt(fan_in), 1/sqrt(fan_in)).

    Weight stored as (in, out) for x @ W; bias as (1, out).
    """
    kw, kb = jax.random.split(key)
    bound = 1.0 / jnp.sqrt(jnp.float32(in_features))
    w = jax.random.uniform(kw, (in_features, out_features), jnp.float32, -bound, bound)
    b = jax.random.uniform(kb, (1, out_features), jnp.float32, -bound, bound)
    return w, b


def make_params(key, input_features, output_values):
    keys = jax.random.split(key, 6)
    w1a, b1a = init_linear(keys[0], input_features, 512)
    w2a, b2a = init_linear(keys[1], 512, 128)
    w3a, b3a = init_linear(keys[2], 128, output_values)
    w1v, b1v = init_linear(keys[3], input_features, 256)
    w2v, b2v = init_linear(keys[4], 256, 32)
    w3v, b3v = init_linear(keys[5], 32, 1)
    return (w1a, b1a, w2a, b2a, w3a, b3a, w1v, b1v, w2v, b2v, w3v, b3v)


def make_fused_params(raw_params, num_actions):
    """Fuse the two streams and fold the dueling combine, once, offline."""
    (w1a, b1a, w2a, b2a, w3a, b3a,
     w1v, b1v, w2v, b2v, w3v, b3v) = raw_params
    h1a, h1v = w1a.shape[1], w1v.shape[1]          # 512, 256
    h2a, h2v = w2a.shape[1], w2v.shape[1]          # 128, 32
    out_pad = max(128, ((num_actions + 127) // 128) * 128)

    # Layer 1: concat along output dim.
    w1 = jnp.concatenate([w1a, w1v], axis=1)                       # (in, 768)
    b1 = jnp.concatenate([b1a, b1v], axis=1)                       # (1, 768)

    # Layer 2: block diagonal.
    w2 = jnp.zeros((h1a + h1v, h2a + h2v), jnp.float32)            # (768, 160)
    w2 = w2.at[:h1a, :h2a].set(w2a)
    w2 = w2.at[h1a:, h2a:].set(w2v)
    b2 = jnp.concatenate([b2a, b2v], axis=1)                       # (1, 160)

    # Layer 3 with the dueling combine folded in (f32, offline):
    #   q[:, j] = h2a @ (w3a[:, j] - mean_k w3a[:, k])
    #           + h2v @ w3v
    #           + (b3a[j] - mean(b3a) + b3v)
    w3a_c = w3a - jnp.mean(w3a, axis=1, keepdims=True)             # (h2a, A)
    w3v_b = jnp.broadcast_to(w3v, (h2v, num_actions))              # (h2v, A)
    b3_c = b3a - jnp.mean(b3a, axis=1, keepdims=True) + b3v        # (1, A)

    w3 = jnp.zeros((h2a + h2v, out_pad), jnp.float32)              # (160, 128)
    w3 = w3.at[:h2a, :num_actions].set(w3a_c)
    w3 = w3.at[h2a:, :num_actions].set(w3v_b)
    b3 = jnp.zeros((1, out_pad), jnp.float32)
    b3 = b3.at[:, :num_actions].set(b3_c)

    # bf16 weights for the MXU (f32 accumulation), f32 biases.
    return (w1.astype(jnp.bfloat16), b1,
            w2.astype(jnp.bfloat16), b2,
            w3.astype(jnp.bfloat16), b3)


# ---------------------------------------------------------------------------
# Wrapper
# ---------------------------------------------------------------------------
def duel_forward(x, fused_params, num_actions):
    batch = x.shape[0]
    # Pad to a multiple of 16: the matmul operands are bf16 (16 sublanes/vreg).
    pad_b = (-batch) % 16
    x_p = jnp.pad(x, ((0, pad_b), (0, 0))) if pad_b else x
    b_pad = x_p.shape[0]
    out_pad = fused_params[4].shape[1]         # lane-padded layer-3 width

    vmem_spec = pl.BlockSpec(memory_space=pltpu.MemorySpace.VMEM)
    q_padded = pl.pallas_call(
        duel_fused_kernel,
        out_shape=jax.ShapeDtypeStruct((b_pad, out_pad), jnp.float32),
        in_specs=[vmem_spec] * (1 + len(fused_params)),
        out_specs=vmem_spec,
    )(x_p, *fused_params)
    return q_padded[:batch, :num_actions]


# ---------------------------------------------------------------------------
# References
# ---------------------------------------------------------------------------
def duel_forward_ref_f32(x, raw_params):
    """Original Duel_Model semantics, pure f32, unfused."""
    (w1a, b1a, w2a, b2a, w3a, b3a,
     w1v, b1v, w2v, b2v, w3v, b3v) = raw_params
    adv = jax.nn.relu(x @ w1a + b1a)
    adv = jax.nn.relu(adv @ w2a + b2a)
    adv = adv @ w3a + b3a
    val = jax.nn.relu(x @ w1v + b1v)
    val = jax.nn.relu(val @ w2v + b2v)
    val = val @ w3v + b3v
    return val + adv - adv.mean(axis=1, keepdims=True)


def duel_forward_ref_fused(x, fused_params, num_actions):
    """Pure-JAX mirror of the exact kernel math (bf16 dots, f32 accumulation,
    dueling combine folded into layer 3)."""
    w1, b1, w2, b2, w3, b3 = fused_params
    batch = x.shape[0]
    pad_b = (-batch) % 16
    xp = jnp.pad(x, ((0, pad_b), (0, 0))) if pad_b else x
    h1 = jnp.maximum(jnp.dot(xp.astype(jnp.bfloat16), w1,
                             preferred_element_type=jnp.float32) + b1, 0.0)
    h2 = jnp.maximum(jnp.dot(h1.astype(jnp.bfloat16), w2,
                             preferred_element_type=jnp.float32) + b2, 0.0)
    q = jnp.dot(h2.astype(jnp.bfloat16), w3,
                preferred_element_type=jnp.float32) + b3
    return q[:batch, :num_actions]


# ---------------------------------------------------------------------------
if __name__ == "__main__":
    key = jax.random.PRNGKey(0)
    k_params, k_x = jax.random.split(key)

    input_features = 32   # small flattened state vector
    output_values = 6     # number of discrete actions
    batch = 2

    raw_params = make_params(k_params, input_features, output_values)
    fused_params = make_fused_params(raw_params, output_values)
    x = jax.random.normal(k_x, (batch, input_features), jnp.float32)

    q = duel_forward(x, fused_params, output_values)
    jax.block_until_ready(q)
    assert q.shape == (batch, output_values)

    # Tight check vs. a pure-JAX mirror of the exact fused/bf16 kernel math.
    q_fused_ref = duel_forward_ref_fused(x, fused_params, output_values)
    assert jnp.allclose(q, q_fused_ref, atol=1e-3, rtol=1e-3), \
        "mismatch vs fused bf16 JAX reference"

    # Loose check vs. the original f32 Duel_Model semantics (bf16 weight cast
    # introduces small, benign numerical differences).
    q_f32_ref = duel_forward_ref_f32(x, raw_params)
    assert jnp.allclose(q, q_f32_ref, atol=5e-2, rtol=5e-2), \
        "mismatch vs f32 Duel_Model reference"

    print("KERNEL_OK")
</pallas_src>

<mosaic_0001>
module attributes {stable_mosaic.version = 11 : i64} {
  func.func @duel_fused_kernel(%arg0: memref<16x32xf32, #tpu.memory_space<vmem>>, %arg1: memref<32x768xbf16, #tpu.memory_space<vmem>>, %arg2: memref<1x768xf32, #tpu.memory_space<vmem>>, %arg3: memref<768x160xbf16, #tpu.memory_space<vmem>>, %arg4: memref<1x160xf32, #tpu.memory_space<vmem>>, %arg5: memref<160x128xbf16, #tpu.memory_space<vmem>>, %arg6: memref<1x128xf32, #tpu.memory_space<vmem>>, %arg7: memref<16x128xf32, #tpu.memory_space<vmem>>) attributes {dimension_semantics = [], scalar_prefetch = 0 : i64, scratch_operands = 0 : i64, tpu.core_type = #tpu.core_type<tc>} {
    %c0 = arith.constant 0 : index
    %c0_0 = arith.constant 0 : index
    %0 = vector.load %arg0[%c0, %c0_0] : memref<16x32xf32, #tpu.memory_space<vmem>>, vector<16x32xf32>
    %1 = arith.truncf %0 : vector<16x32xf32> to vector<16x32xbf16>
    %c0_1 = arith.constant 0 : index
    %c0_2 = arith.constant 0 : index
    %2 = vector.load %arg1[%c0_1, %c0_2] : memref<32x768xbf16, #tpu.memory_space<vmem>>, vector<32x768xbf16>
    %cst = arith.constant dense<0.000000e+00> : vector<16x768xf32>
    %3 = tpu.matmul %1, %2, %cst {dimension_numbers = #tpu.dot_dimension_numbers<[1], [0], [0], [1], [0, 0, 1, 1], [], []>} : vector<16x32xbf16>, vector<32x768xbf16>, vector<16x768xf32> -> vector<16x768xf32>
    %c0_3 = arith.constant 0 : index
    %c0_4 = arith.constant 0 : index
    %4 = vector.load %arg2[%c0_3, %c0_4] : memref<1x768xf32, #tpu.memory_space<vmem>>, vector<1x768xf32>
    %5 = vector.broadcast %4 : vector<1x768xf32> to vector<16x768xf32>
    %6 = arith.addf %3, %5 : vector<16x768xf32>
    %cst_5 = arith.constant 0.000000e+00 : f32
    %7 = vector.broadcast %cst_5 : f32 to vector<16x768xf32>
    %8 = arith.maximumf %6, %7 : vector<16x768xf32>
    %9 = arith.truncf %8 : vector<16x768xf32> to vector<16x768xbf16>
    %c0_6 = arith.constant 0 : index
    %c0_7 = arith.constant 0 : index
    %10 = vector.load %arg3[%c0_6, %c0_7] : memref<768x160xbf16, #tpu.memory_space<vmem>>, vector<768x160xbf16>
    %cst_8 = arith.constant dense<0.000000e+00> : vector<16x160xf32>
    %11 = tpu.matmul %9, %10, %cst_8 {dimension_numbers = #tpu.dot_dimension_numbers<[1], [0], [0], [1], [0, 0, 1, 1], [], []>} : vector<16x768xbf16>, vector<768x160xbf16>, vector<16x160xf32> -> vector<16x160xf32>
    %c0_9 = arith.constant 0 : index
    %c0_10 = arith.constant 0 : index
    %12 = vector.load %arg4[%c0_9, %c0_10] : memref<1x160xf32, #tpu.memory_space<vmem>>, vector<1x160xf32>
    %13 = vector.broadcast %12 : vector<1x160xf32> to vector<16x160xf32>
    %14 = arith.addf %11, %13 : vector<16x160xf32>
    %cst_11 = arith.constant 0.000000e+00 : f32
    %15 = vector.broadcast %cst_11 : f32 to vector<16x160xf32>
    %16 = arith.maximumf %14, %15 : vector<16x160xf32>
    %17 = arith.truncf %16 : vector<16x160xf32> to vector<16x160xbf16>
    %c0_12 = arith.constant 0 : index
    %c0_13 = arith.constant 0 : index
    %18 = vector.load %arg5[%c0_12, %c0_13] : memref<160x128xbf16, #tpu.memory_space<vmem>>, vector<160x128xbf16>
    %cst_14 = arith.constant dense<0.000000e+00> : vector<16x128xf32>
    %19 = tpu.matmul %17, %18, %cst_14 {dimension_numbers = #tpu.dot_dimension_numbers<[1], [0], [0], [1], [0, 0, 1, 1], [], []>} : vector<16x160xbf16>, vector<160x128xbf16>, vector<16x128xf32> -> vector<16x128xf32>
    %c0_15 = arith.constant 0 : index
    %c0_16 = arith.constant 0 : index
    %20 = vector.load %arg6[%c0_15, %c0_16] : memref<1x128xf32, #tpu.memory_space<vmem>>, vector<1x128xf32>
    %21 = vector.broadcast %20 : vector<1x128xf32> to vector<16x128xf32>
    %22 = arith.addf %19, %21 : vector<16x128xf32>
    %c0_17 = arith.constant 0 : index
    %c0_18 = arith.constant 0 : index
    %23 = vector.load %arg7[%c0_17, %c0_18] : memref<16x128xf32, #tpu.memory_space<vmem>>, vector<16x128xf32>
    tpu.vector_store %arg7[%c0_17, %c0_18], %22 {strides = array<i32>} : memref<16x128xf32, #tpu.memory_space<vmem>>, vector<16x128xf32>,
    return
  }
}

</mosaic_0001>

<llo_original>
// kernel: tpu_custom_call.1
$region0: #{tpu_custom_call.1}
  #allocation0 [shape = 'u32[]', space=smem, size = 0x4, offset = 0x4, fixed_abs, tag = 'smem constant byte address 0x4 - core index']
  #allocation1 [shape = 'u32[144,128]{1,0:T(1,128)}', space=vmem, size = 0x12000, scoped, tag = 'internal scratch']
  %s0 = inlined_call_operand.vmem [shape: f32[16,32], index: 0, kind: input, shape index: {}]
  %s1 = inlined_call_operand.vmem [shape: bf16[32,768], index: 1, kind: input, shape index: {}]
  %s2 = inlined_call_operand.vmem [shape: f32[1,768], index: 2, kind: input, shape index: {}]
  %s3 = inlined_call_operand.vmem [shape: bf16[768,160], index: 3, kind: input, shape index: {}]
  %s4 = inlined_call_operand.vmem [shape: f32[1,160], index: 4, kind: input, shape index: {}]
  %s5 = inlined_call_operand.vmem [shape: bf16[160,128], index: 5, kind: input, shape index: {}]
  %s6 = inlined_call_operand.vmem [shape: f32[1,128], index: 6, kind: input, shape index: {}]
  %s7 = inlined_call_operand.hbm [shape: f32[16,128], index: 7, kind: output, shape index: {}]
  %s8 = sld [smem:[#allocation0]]
  $region38: #{tpu_custom_call.1} parent=0
    _
  %s10 = ssub.s32 1, %s8
  %s11 = scalar_select 0, %s10, %s8
  $region1: #{tpu_custom_call.1} parent=0
    #allocation2 [shape = 'u8[8192]{0}', space=vmem, size = 0x2000, scoped, tag = 'output window, operand 0, single buffered']
    #allocation3 [shape = 's32[1]{0}', space=sflag, size = 0x4, scoped, tag = 'scoped memory for tpu_custom_call.1']
    %12 = vsyncpa [#allocation3], 0
    // Predicated region
    $region2: #{tpu_custom_call.1} parent=1 // pred_check
      _
    $region3: #{tpu_custom_call.1} parent=1 // pred_check_branch
      %14 = sbr.rel (0) target = $region5
    $region4: #{tpu_custom_call.1} parent=1 // pred_region
      _
    $region5: #{tpu_custom_call.1} parent=1 // pred_fallthru
      _
    // Predicated region
    $region6: #{tpu_custom_call.1} parent=1 // pred_check
      _
    $region7: #{tpu_custom_call.1} parent=1 // pred_check_branch
      %16 = sbr.rel (0) target = $region9
    $region8: #{tpu_custom_call.1} parent=1 // pred_region
      _
    $region9: #{tpu_custom_call.1} parent=1 // pred_fallthru
      _
    // Predicated region
    $region10: #{tpu_custom_call.1} parent=1 // pred_check
      _
    $region11: #{tpu_custom_call.1} parent=1 // pred_check_branch
      %18 = sbr.rel (0) target = $region13
    $region12: #{tpu_custom_call.1} parent=1 // pred_region
      _
    $region13: #{tpu_custom_call.1} parent=1 // pred_fallthru
      _
    // Predicated region
    $region14: #{tpu_custom_call.1} parent=1 // pred_check
      _
    $region15: #{tpu_custom_call.1} parent=1 // pred_check_branch
      %20 = sbr.rel (0) target = $region17
    $region16: #{tpu_custom_call.1} parent=1 // pred_region
      _
    $region17: #{tpu_custom_call.1} parent=1 // pred_fallthru
      _
    // Predicated region
    $region18: #{tpu_custom_call.1} parent=1 // pred_check
      _
    $region19: #{tpu_custom_call.1} parent=1 // pred_check_branch
      %22 = sbr.rel (0) target = $region21
    $region20: #{tpu_custom_call.1} parent=1 // pred_region
      _
    $region21: #{tpu_custom_call.1} parent=1 // pred_fallthru
      _
    // Predicated region
    $region22: #{tpu_custom_call.1} parent=1 // pred_check
      _
    $region23: #{tpu_custom_call.1} parent=1 // pred_check_branch
      %24 = sbr.rel (0) target = $region25
    $region24: #{tpu_custom_call.1} parent=1 // pred_region
      _
    $region25: #{tpu_custom_call.1} parent=1 // pred_fallthru
      _
    // Predicated region
    $region26: #{tpu_custom_call.1} parent=1 // pred_check
      _
    $region27: #{tpu_custom_call.1} parent=1 // pred_check_branch
      %26 = sbr.rel (0) target = $region29
    $region28: #{tpu_custom_call.1} parent=1 // pred_region
      _
    $region29: #{tpu_custom_call.1} parent=1 // pred_fallthru
      _
    %v28 = vld [vmem:[%s0] sm:$0xff]
    %v29 = vld [vmem:[%s0 + $0x8] sm:$0xff]
    %v30 = vpack.c.bf16 %v29, %v28
    %v31 = vld [vmem:[%s1] sm:$0xff]
    %v32 = vld [vmem:[%s1 + $0x8] sm:$0xff]
    %v33 = vld [vmem:[%s1 + $0x10] sm:$0xff]
    %v34 = vld [vmem:[%s1 + $0x18] sm:$0xff]
    %v35 = vld [vmem:[%s1 + $0x20] sm:$0xff]
    %v36 = vld [vmem:[%s1 + $0x28] sm:$0xff]
    %v37 = vld [vmem:[%s1 + $0x30] sm:$0xff]
    %v38 = vld [vmem:[%s1 + $0x38] sm:$0xff]
    %v39 = vld [vmem:[%s1 + $0x40] sm:$0xff]
    %v40 = vld [vmem:[%s1 + $0x48] sm:$0xff]
    %v41 = vld [vmem:[%s1 + $0x50] sm:$0xff]
    %v42 = vld [vmem:[%s1 + $0x58] sm:$0xff]
    %v43 = vld [vmem:[%s2] sm:$0x3f]
    %v45 = vlaneseq
    %v46 = vshrl.u32 %v45, 7
    %v47 = vsub.s32 0, %v46
    %v48 = vrot.slane %v43, %v47
    %v49 = vlaneseq
    %v50 = vshrl.u32 %v49, 7
    %v51 = vsub.s32 1, %v50
    %v52 = vrot.slane %v43, %v51
    %v53 = vlaneseq
    %v54 = vshrl.u32 %v53, 7
    %v55 = vsub.s32 2, %v54
    %v56 = vrot.slane %v43, %v55
    %v57 = vlaneseq
    %v58 = vshrl.u32 %v57, 7
    %v59 = vsub.s32 3, %v58
    %v60 = vrot.slane %v43, %v59
    %v61 = vlaneseq
    %v62 = vshrl.u32 %v61, 7
    %v63 = vsub.s32 4, %v62
    %v64 = vrot.slane %v43, %v63
    %v65 = vlaneseq
    %v66 = vshrl.u32 %v65, 7
    %v67 = vsub.s32 5, %v66
    %v68 = vrot.slane %v43, %v67
    %v87 = vunpack.c.l.b16 %v31
    %v88 = vunpack.c.h.b16 %v31
    %v89 = vunpack.c.l.b16 %v32
    %v90 = vunpack.c.h.b16 %v32
    %v91 = vunpack.c.l.b16 %v33
    %v92 = vunpack.c.h.b16 %v33
    %v93 = vunpack.c.l.b16 %v34
    %v94 = vunpack.c.h.b16 %v34
    %v95 = vunpack.c.l.b16 %v35
    %v96 = vunpack.c.h.b16 %v35
    %v97 = vunpack.c.l.b16 %v36
    %v98 = vunpack.c.h.b16 %v36
    %v99 = vunpack.c.l.b16 %v37
    %v100 = vunpack.c.h.b16 %v37
    %v101 = vunpack.c.l.b16 %v38
    %v102 = vunpack.c.h.b16 %v38
    %v103 = vunpack.c.l.b16 %v39
    %v104 = vunpack.c.h.b16 %v39
    %v105 = vunpack.c.l.b16 %v40
    %v106 = vunpack.c.h.b16 %v40
    %v107 = vunpack.c.l.b16 %v41
    %v108 = vunpack.c.h.b16 %v41
    %v109 = vunpack.c.l.b16 %v42
    %v110 = vunpack.c.h.b16 %v42
    %v111 = vpack.c.b16 %v93, %v87
    %v112 = vpack.c.b16 %v94, %v88
    %v113 = vpack.c.b16 %v95, %v89
    %v114 = vpack.c.b16 %v96, %v90
    %v115 = vpack.c.b16 %v97, %v91
    %v116 = vpack.c.b16 %v98, %v92
    %v117 = vpack.c.b16 %v105, %v99
    %v118 = vpack.c.b16 %v106, %v100
    %v119 = vpack.c.b16 %v107, %v101
    %v120 = vpack.c.b16 %v108, %v102
    %v121 = vpack.c.b16 %v109, %v103
    %v122 = vpack.c.b16 %v110, %v104
    %vm135 = vcmask 261120
    %v137 = vsel %vm135, %v30, 0
    %139 = vmatprep.subr.bf16.mxu0 %v112
    %140 = vmatpush1.bf16.msra.mxu0 %v111
    %141 = vmatprep.subr.bf16.mxu0 %v118
    %142 = vmatpush1.bf16.msra.mxu0 %v117
    %143 = vmatprep.subr.bf16.mxu0 0
    %144 = vmatpush1.bf16.msra.mxu0 0
    %145 = vmatprep.subr.bf16.mxu0 0
    %146 = vmatpush1.bf16.msra.mxu0 0
    %147 = vmatprep.subr.bf16.mxu0 0
    %148 = vmatpush1.bf16.msra.mxu0 0
    %149 = vmatprep.subr.bf16.mxu0 0
    %150 = vmatpush1.bf16.msra.mxu0 0
    %151 = vmatprep.subr.bf16.mxu0 0
    %152 = vmatpush1.bf16.msra.mxu0 0
    %153 = vmatprep.subr.bf16.mxu0 0
    %154 = vmatpush1.bf16.msra.mxu0 0
    %155 = vmatprep.subr.bf16.mxu0 0
    %156 = vmatpush1.bf16.msra.mxu0 0
    %157 = vmatprep.subr.bf16.mxu0 0
    %158 = vmatpush1.bf16.msra.mxu0 0
    %159 = vmatprep.subr.bf16.mxu0 0
    %160 = vmatpush1.bf16.msra.mxu0 0
    %161 = vmatprep.subr.bf16.mxu0 0
    %162 = vmatpush1.bf16.msra.mxu0 0
    %163 = vmatprep.subr.bf16.mxu0 0
    %164 = vmatpush1.bf16.msra.mxu0 0
    %165 = vmatprep.subr.bf16.mxu0 0
    %166 = vmatpush1.bf16.msra.mxu0 0
    %167 = vmatprep.subr.bf16.mxu0 0
    %168 = vmatpush1.bf16.msra.mxu0 0
    %169 = vmatprep.subr.bf16.mxu0 0
    %170 = vmatpush1.bf16.msra.mxu0 0
    %171 = vmatprep.mubr.bf16.mxu0 0
    %172 = vmatmul.mubr.bf16.gmra.mrb[0].mxu0 %v137
    %v173 = vpop.f32.mrb[0].mxu0
    %v174 = vadd.f32 %v48, %v173
    %v175 = vpop.f32.mrb[0].mxu0
    %v176 = vadd.f32 %v52, %v175
    %v177 = vpop.f32.mrb[0].mxu0
    %v178 = vadd.f32 %v48, %v177
    %v179 = vpop.f32.mrb[0].mxu0
    %v180 = vadd.f32 %v52, %v179
    %181 = vdwg.mxu0
    %182 = vmatprep.subr.bf16.mxu0 %v114
    %183 = vmatpush1.bf16.msra.mxu0 %v113
    %184 = vmatprep.subr.bf16.mxu0 %v120
    %185 = vmatpush1.bf16.msra.mxu0 %v119
    %186 = vmatprep.subr.bf16.mxu0 0
    %187 = vmatpush1.bf16.msra.mxu0 0
    %188 = vmatprep.subr.bf16.mxu0 0
    %189 = vmatpush1.bf16.msra.mxu0 0
    %190 = vmatprep.subr.bf16.mxu0 0
    %191 = vmatpush1.bf16.msra.mxu0 0
    %192 = vmatprep.subr.bf16.mxu0 0
    %193 = vmatpush1.bf16.msra.mxu0 0
    %194 = vmatprep.subr.bf16.mxu0 0
    %195 = vmatpush1.bf16.msra.mxu0 0
    %196 = vmatprep.subr.bf16.mxu0 0
    %197 = vmatpush1.bf16.msra.mxu0 0
    %198 = vmatprep.subr.bf16.mxu0 0
    %199 = vmatpush1.bf16.msra.mxu0 0
    %200 = vmatprep.subr.bf16.mxu0 0
    %201 = vmatpush1.bf16.msra.mxu0 0
    %202 = vmatprep.subr.bf16.mxu0 0
    %203 = vmatpush1.bf16.msra.mxu0 0
    %204 = vmatprep.subr.bf16.mxu0 0
    %205 = vmatpush1.bf16.msra.mxu0 0
    %206 = vmatprep.subr.bf16.mxu0 0
    %207 = vmatpush1.bf16.msra.mxu0 0
    %208 = vmatprep.subr.bf16.mxu0 0
    %209 = vmatpush1.bf16.msra.mxu0 0
    %210 = vmatprep.subr.bf16.mxu0 0
    %211 = vmatpush1.bf16.msra.mxu0 0
    %212 = vmatprep.subr.bf16.mxu0 0
    %213 = vmatpush1.bf16.msra.mxu0 0
    %214 = vmatprep.mubr.bf16.mxu0 0
    %215 = vmatmul.mubr.bf16.gmra.mrb[0].mxu0 %v137
    %v216 = vpop.f32.mrb[0].mxu0
    %v217 = vadd.f32 %v56, %v216
    %v218 = vpop.f32.mrb[0].mxu0
    %v219 = vadd.f32 %v60, %v218
    %v220 = vpop.f32.mrb[0].mxu0
    %v221 = vadd.f32 %v56, %v220
    %v222 = vpop.f32.mrb[0].mxu0
    %v223 = vadd.f32 %v60, %v222
    %224 = vdwg.mxu0
    %225 = vmatprep.subr.bf16.mxu0 %v116
    %226 = vmatpush1.bf16.msra.mxu0 %v115
    %227 = vmatprep.subr.bf16.mxu0 %v122
    %228 = vmatpush1.bf16.msra.mxu0 %v121
    %229 = vmatprep.subr.bf16.mxu0 0
    %230 = vmatpush1.bf16.msra.mxu0 0
    %231 = vmatprep.subr.bf16.mxu0 0
    %232 = vmatpush1.bf16.msra.mxu0 0
    %233 = vmatprep.subr.bf16.mxu0 0
    %234 = vmatpush1.bf16.msra.mxu0 0
    %235 = vmatprep.subr.bf16.mxu0 0
    %236 = vmatpush1.bf16.msra.mxu0 0
    %237 = vmatprep.subr.bf16.mxu0 0
    %238 = vmatpush1.bf16.msra.mxu0 0
    %239 = vmatprep.subr.bf16.mxu0 0
    %240 = vmatpush1.bf16.msra.mxu0 0
    %241 = vmatprep.subr.bf16.mxu0 0
    %242 = vmatpush1.bf16.msra.mxu0 0
    %243 = vmatprep.subr.bf16.mxu0 0
    %244 = vmatpush1.bf16.msra.mxu0 0
    %245 = vmatprep.subr.bf16.mxu0 0
    %246 = vmatpush1.bf16.msra.mxu0 0
    %247 = vmatprep.subr.bf16.mxu0 0
    %248 = vmatpush1.bf16.msra.mxu0 0
    %249 = vmatprep.subr.bf16.mxu0 0
    %250 = vmatpush1.bf16.msra.mxu0 0
    %251 = vmatprep.subr.bf16.mxu0 0
    %252 = vmatpush1.bf16.msra.mxu0 0
    %253 = vmatprep.subr.bf16.mxu0 0
    %254 = vmatpush1.bf16.msra.mxu0 0
    %255 = vmatprep.subr.bf16.mxu0 0
    %256 = vmatpush1.bf16.msra.mxu0 0
    %257 = vmatprep.mubr.bf16.mxu0 0
    %258 = vmatmul.mubr.bf16.gmra.mrb[0].mxu0 %v137
    %v259 = vpop.f32.mrb[0].mxu0
    %v260 = vadd.f32 %v64, %v259
    %v261 = vpop.f32.mrb[0].mxu0
    %v262 = vadd.f32 %v68, %v261
    %v263 = vpop.f32.mrb[0].mxu0
    %v264 = vadd.f32 %v64, %v263
    %v265 = vpop.f32.mrb[0].mxu0
    %v266 = vadd.f32 %v68, %v265
    %267 = vdwg.mxu0
    %v268 = vmax.f32 %v174, 0.0
    %v269 = vmax.f32 %v176, 0.0
    %v270 = vmax.f32 %v217, 0.0
    %v271 = vmax.f32 %v219, 0.0
    %v272 = vmax.f32 %v260, 0.0
    %v273 = vmax.f32 %v262, 0.0
    %v274 = vmax.f32 %v178, 0.0
    %v275 = vmax.f32 %v180, 0.0
    %v276 = vmax.f32 %v221, 0.0
    %v277 = vmax.f32 %v223, 0.0
    %v278 = vmax.f32 %v264, 0.0
    %v279 = vmax.f32 %v266, 0.0
    %v280 = vpack.c.bf16 %v274, %v268
    %v281 = vpack.c.bf16 %v275, %v269
    %v282 = vpack.c.bf16 %v276, %v270
    %v283 = vpack.c.bf16 %v277, %v271
    %v284 = vpack.c.bf16 %v278, %v272
    %v285 = vpack.c.bf16 %v279, %v273
    %v286 = vld [vmem:[%s3] sm:$0xff]
    %v287 = vld [vmem:[%s3 + $0x8] sm:$0xff]
    %v288 = vld [vmem:[%s3 + $0x10] sm:$0xff]
    %v289 = vld [vmem:[%s3 + $0x18] sm:$0xff]
    %v290 = vld [vmem:[%s3 + $0x20] sm:$0xff]
    %v291 = vld [vmem:[%s3 + $0x28] sm:$0xff]
    %v292 = vld [vmem:[%s3 + $0x30] sm:$0xff]
    %v293 = vld [vmem:[%s3 + $0x38] sm:$0xff]
    %v294 = vld [vmem:[%s3 + $0x40] sm:$0xff]
    %v295 = vld [vmem:[%s3 + $0x48] sm:$0xff]
    %v296 = vld [vmem:[%s3 + $0x50] sm:$0xff]
    %v297 = vld [vmem:[%s3 + $0x58] sm:$0xff]
    %v298 = vld [vmem:[%s3 + $0x60] sm:$0xff]
    %v299 = vld [vmem:[%s3 + $0x68] sm:$0xff]
    %v300 = vld [vmem:[%s3 + $0x70] sm:$0xff]
    %v301 = vld [vmem:[%s3 + $0x78] sm:$0xff]
    %v302 = vld [vmem:[%s3 + $0x80] sm:$0xff]
    %v303 = vld [vmem:[%s3 + $0x88] sm:$0xff]
    %v304 = vld [vmem:[%s3 + $0x90] sm:$0xff]
    %v305 = vld [vmem:[%s3 + $0x98] sm:$0xff]
    %v306 = vld [vmem:[%s3 + $0xa0] sm:$0xff]
    %v307 = vld [vmem:[%s3 + $0xa8] sm:$0xff]
    %v308 = vld [vmem:[%s3 + $0xb0] sm:$0xff]
    %v309 = vld [vmem:[%s3 + $0xb8] sm:$0xff]
    %v310 = vld [vmem:[%s3 + $0xc0] sm:$0xff]
    %v311 = vld [vmem:[%s3 + $0xc8] sm:$0xff]
    %v312 = vld [vmem:[%s3 + $0xd0] sm:$0xff]
    %v313 = vld [vmem:[%s3 + $0xd8] sm:$0xff]
    %v314 = vld [vmem:[%s3 + $0xe0] sm:$0xff]
    %v315 = vld [vmem:[%s3 + $0xe8] sm:$0xff]
    %v316 = vld [vmem:[%s3 + $0xf0] sm:$0xff]
    %v317 = vld [vmem:[%s3 + $0xf8] sm:$0xff]
    %v318 = vld [vmem:[%s3 + $0x100] sm:$0xff]
    %v319 = vld [vmem:[%s3 + $0x108] sm:$0xff]
    %v320 = vld [vmem:[%s3 + $0x110] sm:$0xff]
    %v321 = vld [vmem:[%s3 + $0x118] sm:$0xff]
    %v322 = vld [vmem:[%s3 + $0x120] sm:$0xff]
    %v323 = vld [vmem:[%s3 + $0x128] sm:$0xff]
    %v324 = vld [vmem:[%s3 + $0x130] sm:$0xff]
    %v325 = vld [vmem:[%s3 + $0x138] sm:$0xff]
    %v326 = vld [vmem:[%s3 + $0x140] sm:$0xff]
    %v327 = vld [vmem:[%s3 + $0x148] sm:$0xff]
    %v328 = vld [vmem:[%s3 + $0x150] sm:$0xff]
    %v329 = vld [vmem:[%s3 + $0x158] sm:$0xff]
    %v330 = vld [vmem:[%s3 + $0x160] sm:$0xff]
    %v331 = vld [vmem:[%s3 + $0x168] sm:$0xff]
    %v332 = vld [vmem:[%s3 + $0x170] sm:$0xff]
    %v333 = vld [vmem:[%s3 + $0x178] sm:$0xff]
    %v334 = vld [vmem:[%s3 + $0x180] sm:$0xff]
    %v335 = vld [vmem:[%s3 + $0x188] sm:$0xff]
    %v336 = vld [vmem:[%s3 + $0x190] sm:$0xff]
    %v337 = vld [vmem:[%s3 + $0x198] sm:$0xff]
    %v338 = vld [vmem:[%s3 + $0x1a0] sm:$0xff]
    %v339 = vld [vmem:[%s3 + $0x1a8] sm:$0xff]
    %v340 = vld [vmem:[%s3 + $0x1b0] sm:$0xff]
    %v341 = vld [vmem:[%s3 + $0x1b8] sm:$0xff]
    %v342 = vld [vmem:[%s3 + $0x1c0] sm:$0xff]
    %v343 = vld [vmem:[%s3 + $0x1c8] sm:$0xff]
    %v344 = vld [vmem:[%s3 + $0x1d0] sm:$0xff]
    %v345 = vld [vmem:[%s3 + $0x1d8] sm:$0xff]
    %v346 = vld [vmem:[%s3 + $0x1e0] sm:$0xff]
    %v347 = vld [vmem:[%s3 + $0x1e8] sm:$0xff]
    %v348 = vld [vmem:[%s3 + $0x1f0] sm:$0xff]
    %v349 = vld [vmem:[%s3 + $0x1f8] sm:$0xff]
    %v350 = vld [vmem:[%s3 + $0x200] sm:$0xff]
    %v351 = vld [vmem:[%s3 + $0x208] sm:$0xff]
    %v352 = vld [vmem:[%s3 + $0x210] sm:$0xff]
    %v353 = vld [vmem:[%s3 + $0x218] sm:$0xff]
    %v354 = vld [vmem:[%s3 + $0x220] sm:$0xff]
    %v355 = vld [vmem:[%s3 + $0x228] sm:$0xff]
    %v356 = vld [vmem:[%s3 + $0x230] sm:$0xff]
    %v357 = vld [vmem:[%s3 + $0x238] sm:$0xff]
    %v358 = vld [vmem:[%s3 + $0x240] sm:$0xff]
    %v359 = vld [vmem:[%s3 + $0x248] sm:$0xff]
    %v360 = vld [vmem:[%s3 + $0x250] sm:$0xff]
    %v361 = vld [vmem:[%s3 + $0x258] sm:$0xff]
    %v362 = vld [vmem:[%s3 + $0x260] sm:$0xff]
    %v363 = vld [vmem:[%s3 + $0x268] sm:$0xff]
    %v364 = vld [vmem:[%s3 + $0x270] sm:$0xff]
    %v365 = vld [vmem:[%s3 + $0x278] sm:$0xff]
    %v366 = vld [vmem:[%s3 + $0x280] sm:$0xff]
    %v367 = vld [vmem:[%s3 + $0x288] sm:$0xff]
    %v368 = vld [vmem:[%s3 + $0x290] sm:$0xff]
    %v369 = vld [vmem:[%s3 + $0x298] sm:$0xff]
    %v370 = vld [vmem:[%s3 + $0x2a0] sm:$0xff]
    %v371 = vld [vmem:[%s3 + $0x2a8] sm:$0xff]
    %v372 = vld [vmem:[%s3 + $0x2b0] sm:$0xff]
    %v373 = vld [vmem:[%s3 + $0x2b8] sm:$0xff]
    %v374 = vld [vmem:[%s3 + $0x2c0] sm:$0xff]
    %v375 = vld [vmem:[%s3 + $0x2c8] sm:$0xff]
    %v376 = vld [vmem:[%s3 + $0x2d0] sm:$0xff]
    %v377 = vld [vmem:[%s3 + $0x2d8] sm:$0xff]
    %v378 = vld [vmem:[%s3 + $0x2e0] sm:$0xff]
    %v379 = vld [vmem:[%s3 + $0x2e8] sm:$0xff]
    %v380 = vld [vmem:[%s3 + $0x2f0] sm:$0xff]
    %v381 = vld [vmem:[%s3 + $0x2f8] sm:$0xff]
    %v382 = vld [vmem:[%s4] sm:$0x3]
    %v384 = vlaneseq
    %v385 = vshrl.u32 %v384, 7
    %v386 = vsub.s32 0, %v385
    %v387 = vrot.slane %v382, %v386
    %v388 = vlaneseq
    %v389 = vshrl.u32 %v388, 7
    %v390 = vsub.s32 1, %v389
    %v391 = vrot.slane %v382, %v390
    %v490 = vunpack.c.l.b16 %v286
    %v491 = vunpack.c.h.b16 %v286
    %v492 = vunpack.c.l.b16 %v287
    %v493 = vunpack.c.h.b16 %v287
    %v494 = vunpack.c.l.b16 %v288
    %v495 = vunpack.c.h.b16 %v288
    %v496 = vunpack.c.l.b16 %v289
    %v497 = vunpack.c.h.b16 %v289
    %v498 = vunpack.c.l.b16 %v290
    %v499 = vunpack.c.h.b16 %v290
    %v500 = vunpack.c.l.b16 %v291
    %v501 = vunpack.c.h.b16 %v291
    %v502 = vunpack.c.l.b16 %v292
    %v503 = vunpack.c.h.b16 %v292
    %v504 = vunpack.c.l.b16 %v293
    %v505 = vunpack.c.h.b16 %v293
    %v506 = vunpack.c.l.b16 %v294
    %v507 = vunpack.c.h.b16 %v294
    %v508 = vunpack.c.l.b16 %v295
    %v509 = vunpack.c.h.b16 %v295
    %v510 = vunpack.c.l.b16 %v296
    %v511 = vunpack.c.h.b16 %v296
    %v512 = vunpack.c.l.b16 %v297
    %v513 = vunpack.c.h.b16 %v297
    %v514 = vunpack.c.l.b16 %v298
    %v515 = vunpack.c.h.b16 %v298
    %v516 = vunpack.c.l.b16 %v299
    %v517 = vunpack.c.h.b16 %v299
    %v518 = vunpack.c.l.b16 %v300
    %v519 = vunpack.c.h.b16 %v300
    %v520 = vunpack.c.l.b16 %v301
    %v521 = vunpack.c.h.b16 %v301
    %v522 = vunpack.c.l.b16 %v302
    %v523 = vunpack.c.h.b16 %v302
    %v524 = vunpack.c.l.b16 %v303
    %v525 = vunpack.c.h.b16 %v303
    %v526 = vunpack.c.l.b16 %v304
    %v527 = vunpack.c.h.b16 %v304
    %v528 = vunpack.c.l.b16 %v305
    %v529 = vunpack.c.h.b16 %v305
    %v530 = vunpack.c.l.b16 %v306
    %v531 = vunpack.c.h.b16 %v306
    %v532 = vunpack.c.l.b16 %v307
    %v533 = vunpack.c.h.b16 %v307
    %v534 = vunpack.c.l.b16 %v308
    %v535 = vunpack.c.h.b16 %v308
    %v536 = vunpack.c.l.b16 %v309
    %v537 = vunpack.c.h.b16 %v309
    %v538 = vunpack.c.l.b16 %v310
    %v539 = vunpack.c.h.b16 %v310
    %v540 = vunpack.c.l.b16 %v311
    %v541 = vunpack.c.h.b16 %v311
    %v542 = vunpack.c.l.b16 %v312
    %v543 = vunpack.c.h.b16 %v312
    %v544 = vunpack.c.l.b16 %v313
    %v545 = vunpack.c.h.b16 %v313
    %v546 = vunpack.c.l.b16 %v314
    %v547 = vunpack.c.h.b16 %v314
    %v548 = vunpack.c.l.b16 %v315
    %v549 = vunpack.c.h.b16 %v315
    %v550 = vunpack.c.l.b16 %v316
    %v551 = vunpack.c.h.b16 %v316
    %v552 = vunpack.c.l.b16 %v317
    %v553 = vunpack.c.h.b16 %v317
    %v554 = vunpack.c.l.b16 %v318
    %v555 = vunpack.c.h.b16 %v318
    %v556 = vunpack.c.l.b16 %v319
    %v557 = vunpack.c.h.b16 %v319
    %v558 = vunpack.c.l.b16 %v320
    %v559 = vunpack.c.h.b16 %v320
    %v560 = vunpack.c.l.b16 %v321
    %v561 = vunpack.c.h.b16 %v321
    %v562 = vunpack.c.l.b16 %v322
    %v563 = vunpack.c.h.b16 %v322
    %v564 = vunpack.c.l.b16 %v323
    %v565 = vunpack.c.h.b16 %v323
    %v566 = vunpack.c.l.b16 %v324
    %v567 = vunpack.c.h.b16 %v324
    %v568 = vunpack.c.l.b16 %v325
    %v569 = vunpack.c.h.b16 %v325
    %v570 = vunpack.c.l.b16 %v326
    %v571 = vunpack.c.h.b16 %v326
    %v572 = vunpack.c.l.b16 %v327
    %v573 = vunpack.c.h.b16 %v327
    %v574 = vunpack.c.l.b16 %v328
    %v575 = vunpack.c.h.b16 %v328
    %v576 = vunpack.c.l.b16 %v329
    %v577 = vunpack.c.h.b16 %v329
    %v578 = vunpack.c.l.b16 %v330
    %v579 = vunpack.c.h.b16 %v330
    %v580 = vunpack.c.l.b16 %v331
    %v581 = vunpack.c.h.b16 %v331
    %v582 = vunpack.c.l.b16 %v332
    %v583 = vunpack.c.h.b16 %v332
    %v584 = vunpack.c.l.b16 %v333
    %v585 = vunpack.c.h.b16 %v333
    %v586 = vunpack.c.l.b16 %v334
    %v587 = vunpack.c.h.b16 %v334
    %v588 = vunpack.c.l.b16 %v335
    %v589 = vunpack.c.h.b16 %v335
    %v590 = vunpack.c.l.b16 %v336
    %v591 = vunpack.c.h.b16 %v336
    %v592 = vunpack.c.l.b16 %v337
    %v593 = vunpack.c.h.b16 %v337
    %v594 = vunpack.c.l.b16 %v338
    %v595 = vunpack.c.h.b16 %v338
    %v596 = vunpack.c.l.b16 %v339
    %v597 = vunpack.c.h.b16 %v339
    %v598 = vunpack.c.l.b16 %v340
    %v599 = vunpack.c.h.b16 %v340
    %v600 = vunpack.c.l.b16 %v341
    %v601 = vunpack.c.h.b16 %v341
    %v602 = vunpack.c.l.b16 %v342
    %v603 = vunpack.c.h.b16 %v342
    %v604 = vunpack.c.l.b16 %v343
    %v605 = vunpack.c.h.b16 %v343
    %v606 = vunpack.c.l.b16 %v344
    %v607 = vunpack.c.h.b16 %v344
    %v608 = vunpack.c.l.b16 %v345
    %v609 = vunpack.c.h.b16 %v345
    %v610 = vunpack.c.l.b16 %v346
    %v611 = vunpack.c.h.b16 %v346
    %v612 = vunpack.c.l.b16 %v347
    %v613 = vunpack.c.h.b16 %v347
    %v614 = vunpack.c.l.b16 %v348
    %v615 = vunpack.c.h.b16 %v348
    %v616 = vunpack.c.l.b16 %v349
    %v617 = vunpack.c.h.b16 %v349
    %v618 = vunpack.c.l.b16 %v350
    %v619 = vunpack.c.h.b16 %v350
    %v620 = vunpack.c.l.b16 %v351
    %v621 = vunpack.c.h.b16 %v351
    %v622 = vunpack.c.l.b16 %v352
    %v623 = vunpack.c.h.b16 %v352
    %v624 = vunpack.c.l.b16 %v353
    %v625 = vunpack.c.h.b16 %v353
    %v626 = vunpack.c.l.b16 %v354
    %v627 = vunpack.c.h.b16 %v354
    %v628 = vunpack.c.l.b16 %v355
    %v629 = vunpack.c.h.b16 %v355
    %v630 = vunpack.c.l.b16 %v356
    %v631 = vunpack.c.h.b16 %v356
    %v632 = vunpack.c.l.b16 %v357
    %v633 = vunpack.c.h.b16 %v357
    %v634 = vunpack.c.l.b16 %v358
    %v635 = vunpack.c.h.b16 %v358
    %v636 = vunpack.c.l.b16 %v359
    %v637 = vunpack.c.h.b16 %v359
    %v638 = vunpack.c.l.b16 %v360
    %v639 = vunpack.c.h.b16 %v360
    %v640 = vunpack.c.l.b16 %v361
    %v641 = vunpack.c.h.b16 %v361
    %v642 = vunpack.c.l.b16 %v362
    %v643 = vunpack.c.h.b16 %v362
    %v644 = vunpack.c.l.b16 %v363
    %v645 = vunpack.c.h.b16 %v363
    %v646 = vunpack.c.l.b16 %v364
    %v647 = vunpack.c.h.b16 %v364
    %v648 = vunpack.c.l.b16 %v365
    %v649 = vunpack.c.h.b16 %v365
    %v650 = vunpack.c.l.b16 %v366
    %v651 = vunpack.c.h.b16 %v366
    %v652 = vunpack.c.l.b16 %v367
    %v653 = vunpack.c.h.b16 %v367
    %v654 = vunpack.c.l.b16 %v368
    %v655 = vunpack.c.h.b16 %v368
    %v656 = vunpack.c.l.b16 %v369
    %v657 = vunpack.c.h.b16 %v369
    %v658 = vunpack.c.l.b16 %v370
    %v659 = vunpack.c.h.b16 %v370
    %v660 = vunpack.c.l.b16 %v371
    %v661 = vunpack.c.h.b16 %v371
    %v662 = vunpack.c.l.b16 %v372
    %v663 = vunpack.c.h.b16 %v372
    %v664 = vunpack.c.l.b16 %v373
    %v665 = vunpack.c.h.b16 %v373
    %v666 = vunpack.c.l.b16 %v374
    %v667 = vunpack.c.h.b16 %v374
    %v668 = vunpack.c.l.b16 %v375
    %v669 = vunpack.c.h.b16 %v375
    %v670 = vunpack.c.l.b16 %v376
    %v671 = vunpack.c.h.b16 %v376
    %v672 = vunpack.c.l.b16 %v377
    %v673 = vunpack.c.h.b16 %v377
    %v674 = vunpack.c.l.b16 %v378
    %v675 = vunpack.c.h.b16 %v378
    %v676 = vunpack.c.l.b16 %v379
    %v677 = vunpack.c.h.b16 %v379
    %v678 = vunpack.c.l.b16 %v380
    %v679 = vunpack.c.h.b16 %v380
    %v680 = vunpack.c.l.b16 %v381
    %v681 = vunpack.c.h.b16 %v381
    %v682 = vpack.c.b16 %v492, %v490
    %v683 = vpack.c.b16 %v493, %v491
    %v684 = vpack.c.b16 %v496, %v494
    %v685 = vpack.c.b16 %v497, %v495
    %v686 = vpack.c.b16 %v500, %v498
    %v687 = vpack.c.b16 %v501, %v499
    %v688 = vpack.c.b16 %v504, %v502
    %v689 = vpack.c.b16 %v505, %v503
    %v690 = vpack.c.b16 %v508, %v506
    %v691 = vpack.c.b16 %v509, %v507
    %v692 = vpack.c.b16 %v512, %v510
    %v693 = vpack.c.b16 %v513, %v511
    %v694 = vpack.c.b16 %v516, %v514
    %v695 = vpack.c.b16 %v517, %v515
    %v696 = vpack.c.b16 %v520, %v518
    %v697 = vpack.c.b16 %v521, %v519
    %v698 = vpack.c.b16 %v524, %v522
    %v699 = vpack.c.b16 %v525, %v523
    %v700 = vpack.c.b16 %v528, %v526
    %v701 = vpack.c.b16 %v529, %v527
    %v702 = vpack.c.b16 %v532, %v530
    %v703 = vpack.c.b16 %v533, %v531
    %v704 = vpack.c.b16 %v536, %v534
    %v705 = vpack.c.b16 %v537, %v535
    %v706 = vpack.c.b16 %v540, %v538
    %v707 = vpack.c.b16 %v541, %v539
    %v708 = vpack.c.b16 %v544, %v542
    %v709 = vpack.c.b16 %v545, %v543
    %v710 = vpack.c.b16 %v548, %v546
    %v711 = vpack.c.b16 %v549, %v547
    %v712 = vpack.c.b16 %v552, %v550
    %v713 = vpack.c.b16 %v553, %v551
    %v714 = vpack.c.b16 %v556, %v554
    %v715 = vpack.c.b16 %v557, %v555
    %v716 = vpack.c.b16 %v560, %v558
    %v717 = vpack.c.b16 %v561, %v559
    %v718 = vpack.c.b16 %v564, %v562
    %v719 = vpack.c.b16 %v565, %v563
    %v720 = vpack.c.b16 %v568, %v566
    %v721 = vpack.c.b16 %v569, %v567
    %v722 = vpack.c.b16 %v572, %v570
    %v723 = vpack.c.b16 %v573, %v571
    %v724 = vpack.c.b16 %v576, %v574
    %v725 = vpack.c.b16 %v577, %v575
    %v726 = vpack.c.b16 %v580, %v578
    %v727 = vpack.c.b16 %v581, %v579
    %v728 = vpack.c.b16 %v584, %v582
    %v729 = vpack.c.b16 %v585, %v583
    %v730 = vpack.c.b16 %v588, %v586
    %v731 = vpack.c.b16 %v589, %v587
    %v732 = vpack.c.b16 %v592, %v590
    %v733 = vpack.c.b16 %v593, %v591
    %v734 = vpack.c.b16 %v596, %v594
    %v735 = vpack.c.b16 %v597, %v595
    %v736 = vpack.c.b16 %v600, %v598
    %v737 = vpack.c.b16 %v601, %v599
    %v738 = vpack.c.b16 %v604, %v602
    %v739 = vpack.c.b16 %v605, %v603
    %v740 = vpack.c.b16 %v608, %v606
    %v741 = vpack.c.b16 %v609, %v607
    %v742 = vpack.c.b16 %v612, %v610
    %v743 = vpack.c.b16 %v613, %v611
    %v744 = vpack.c.b16 %v616, %v614
    %v745 = vpack.c.b16 %v617, %v615
    %v746 = vpack.c.b16 %v620, %v618
    %v747 = vpack.c.b16 %v621, %v619
    %v748 = vpack.c.b16 %v624, %v622
    %v749 = vpack.c.b16 %v625, %v623
    %v750 = vpack.c.b16 %v628, %v626
    %v751 = vpack.c.b16 %v629, %v627
    %v752 = vpack.c.b16 %v632, %v630
    %v753 = vpack.c.b16 %v633, %v631
    %v754 = vpack.c.b16 %v636, %v634
    %v755 = vpack.c.b16 %v637, %v635
    %v756 = vpack.c.b16 %v640, %v638
    %v757 = vpack.c.b16 %v641, %v639
    %v758 = vpack.c.b16 %v644, %v642
    %v759 = vpack.c.b16 %v645, %v643
    %v760 = vpack.c.b16 %v648, %v646
    %v761 = vpack.c.b16 %v649, %v647
    %v762 = vpack.c.b16 %v652, %v650
    %v763 = vpack.c.b16 %v653, %v651
    %v764 = vpack.c.b16 %v656, %v654
    %v765 = vpack.c.b16 %v657, %v655
    %v766 = vpack.c.b16 %v660, %v658
    %v767 = vpack.c.b16 %v661, %v659
    %v768 = vpack.c.b16 %v664, %v662
    %v769 = vpack.c.b16 %v665, %v663
    %v770 = vpack.c.b16 %v668, %v666
    %v771 = vpack.c.b16 %v669, %v667
    %v772 = vpack.c.b16 %v672, %v670
    %v773 = vpack.c.b16 %v673, %v671
    %v774 = vpack.c.b16 %v676, %v674
    %v775 = vpack.c.b16 %v677, %v675
    %v776 = vpack.c.b16 %v680, %v678
    %v777 = vpack.c.b16 %v681, %v679
    %874 = vmatprep.subr.bf16.mxu0 %v683
    %875 = vmatpush1.bf16.msra.mxu0 %v682
    %876 = vmatprep.subr.bf16.mxu0 %v685
    %877 = vmatpush1.bf16.msra.mxu0 %v684
    %878 = vmatprep.subr.bf16.mxu0 %v687
    %879 = vmatpush1.bf16.msra.mxu0 %v686
    %880 = vmatprep.subr.bf16.mxu0 %v689
    %881 = vmatpush1.bf16.msra.mxu0 %v688
    %882 = vmatprep.subr.bf16.mxu0 %v691
    %883 = vmatpush1.bf16.msra.mxu0 %v690
    %884 = vmatprep.subr.bf16.mxu0 %v693
    %885 = vmatpush1.bf16.msra.mxu0 %v692
    %886 = vmatprep.subr.bf16.mxu0 %v695
    %887 = vmatpush1.bf16.msra.mxu0 %v694
    %888 = vmatprep.subr.bf16.mxu0 %v697
    %889 = vmatpush1.bf16.msra.mxu0 %v696
    %890 = vmatprep.subr.bf16.mxu0 %v699
    %891 = vmatpush1.bf16.msra.mxu0 %v698
    %892 = vmatprep.subr.bf16.mxu0 %v701
    %893 = vmatpush1.bf16.msra.mxu0 %v700
    %894 = vmatprep.subr.bf16.mxu0 %v703
    %895 = vmatpush1.bf16.msra.mxu0 %v702
    %896 = vmatprep.subr.bf16.mxu0 %v705
    %897 = vmatpush1.bf16.msra.mxu0 %v704
    %898 = vmatprep.subr.bf16.mxu0 %v707
    %899 = vmatpush1.bf16.msra.mxu0 %v706
    %900 = vmatprep.subr.bf16.mxu0 %v709
    %901 = vmatpush1.bf16.msra.mxu0 %v708
    %902 = vmatprep.subr.bf16.mxu0 %v711
    %903 = vmatpush1.bf16.msra.mxu0 %v710
    %904 = vmatprep.subr.bf16.mxu0 %v713
    %905 = vmatpush1.bf16.msra.mxu0 %v712
    %906 = vmatprep.mubr.bf16.mxu0 %v281
    %907 = vmatmul.mubr.bf16.gmra.mrb[0].mxu0 %v280
    %v908 = vpop.f32.mrb[0].mxu0
    %v909 = vadd.f32 %v387, %v908
    %v910 = vpop.f32.mrb[0].mxu0
    %v911 = vadd.f32 %v391, %v910
    %v912 = vpop.f32.mrb[0].mxu0
    %v913 = vadd.f32 %v387, %v912
    %v914 = vpop.f32.mrb[0].mxu0
    %v915 = vadd.f32 %v391, %v914
    %916 = vdwg.mxu0
    %917 = vmatprep.subr.bf16.mxu0 %v715
    %918 = vmatpush1.bf16.msra.mxu0 %v714
    %919 = vmatprep.subr.bf16.mxu0 %v717
    %920 = vmatpush1.bf16.msra.mxu0 %v716
    %921 = vmatprep.subr.bf16.mxu0 %v719
    %922 = vmatpush1.bf16.msra.mxu0 %v718
    %923 = vmatprep.subr.bf16.mxu0 %v721
    %924 = vmatpush1.bf16.msra.mxu0 %v720
    %925 = vmatprep.subr.bf16.mxu0 %v723
    %926 = vmatpush1.bf16.msra.mxu0 %v722
    %927 = vmatprep.subr.bf16.mxu0 %v725
    %928 = vmatpush1.bf16.msra.mxu0 %v724
    %929 = vmatprep.subr.bf16.mxu0 %v727
    %930 = vmatpush1.bf16.msra.mxu0 %v726
    %931 = vmatprep.subr.bf16.mxu0 %v729
    %932 = vmatpush1.bf16.msra.mxu0 %v728
    %933 = vmatprep.subr.bf16.mxu0 %v731
    %934 = vmatpush1.bf16.msra.mxu0 %v730
    %935 = vmatprep.subr.bf16.mxu0 %v733
    %936 = vmatpush1.bf16.msra.mxu0 %v732
    %937 = vmatprep.subr.bf16.mxu0 %v735
    %938 = vmatpush1.bf16.msra.mxu0 %v734
    %939 = vmatprep.subr.bf16.mxu0 %v737
    %940 = vmatpush1.bf16.msra.mxu0 %v736
    %941 = vmatprep.subr.bf16.mxu0 %v739
    %942 = vmatpush1.bf16.msra.mxu0 %v738
    %943 = vmatprep.subr.bf16.mxu0 %v741
    %944 = vmatpush1.bf16.msra.mxu0 %v740
    %945 = vmatprep.subr.bf16.mxu0 %v743
    %946 = vmatpush1.bf16.msra.mxu0 %v742
    %947 = vmatprep.subr.bf16.mxu0 %v745
    %948 = vmatpush1.bf16.msra.mxu0 %v744
    %949 = vmatprep.mubr.bf16.mxu0 %v283
    %950 = vmatmul.mubr.bf16.gmra.mrb[0].mxu0 %v282
    %v951 = vpop.f32.mrb[0].mxu0
    %v952 = vadd.f32 %v909, %v951
    %v953 = vpop.f32.mrb[0].mxu0
    %v954 = vadd.f32 %v911, %v953
    %v955 = vpop.f32.mrb[0].mxu0
    %v956 = vadd.f32 %v913, %v955
    %v957 = vpop.f32.mrb[0].mxu0
    %v958 = vadd.f32 %v915, %v957
    %959 = vdwg.mxu0
    %960 = vmatprep.subr.bf16.mxu0 %v747
    %961 = vmatpush1.bf16.msra.mxu0 %v746
    %962 = vmatprep.subr.bf16.mxu0 %v749
    %963 = vmatpush1.bf16.msra.mxu0 %v748
    %964 = vmatprep.subr.bf16.mxu0 %v751
    %965 = vmatpush1.bf16.msra.mxu0 %v750
    %966 = vmatprep.subr.bf16.mxu0 %v753
    %967 = vmatpush1.bf16.msra.mxu0 %v752
    %968 = vmatprep.subr.bf16.mxu0 %v755
    %969 = vmatpush1.bf16.msra.mxu0 %v754
    %970 = vmatprep.subr.bf16.mxu0 %v757
    %971 = vmatpush1.bf16.msra.mxu0 %v756
    %972 = vmatprep.subr.bf16.mxu0 %v759
    %973 = vmatpush1.bf16.msra.mxu0 %v758
    %974 = vmatprep.subr.bf16.mxu0 %v761
    %975 = vmatpush1.bf16.msra.mxu0 %v760
    %976 = vmatprep.subr.bf16.mxu0 %v763
    %977 = vmatpush1.bf16.msra.mxu0 %v762
    %978 = vmatprep.subr.bf16.mxu0 %v765
    %979 = vmatpush1.bf16.msra.mxu0 %v764
    %980 = vmatprep.subr.bf16.mxu0 %v767
    %981 = vmatpush1.bf16.msra.mxu0 %v766
    %982 = vmatprep.subr.bf16.mxu0 %v769
    %983 = vmatpush1.bf16.msra.mxu0 %v768
    %984 = vmatprep.subr.bf16.mxu0 %v771
    %985 = vmatpush1.bf16.msra.mxu0 %v770
    %986 = vmatprep.subr.bf16.mxu0 %v773
    %987 = vmatpush1.bf16.msra.mxu0 %v772
    %988 = vmatprep.subr.bf16.mxu0 %v775
    %989 = vmatpush1.bf16.msra.mxu0 %v774
    %990 = vmatprep.subr.bf16.mxu0 %v777
    %991 = vmatpush1.bf16.msra.mxu0 %v776
    %992 = vmatprep.mubr.bf16.mxu0 %v285
    %993 = vmatmul.mubr.bf16.gmra.mrb[0].mxu0 %v284
    %v994 = vpop.f32.mrb[0].mxu0
    %v995 = vadd.f32 %v952, %v994
    %v996 = vpop.f32.mrb[0].mxu0
    %v997 = vadd.f32 %v954, %v996
    %v998 = vpop.f32.mrb[0].mxu0
    %v999 = vadd.f32 %v956, %v998
    %v1000 = vpop.f32.mrb[0].mxu0
    %v1001 = vadd.f32 %v958, %v1000
    %1002 = vdwg.mxu0
    %v1003 = vmax.f32 %v995, 0.0
    %v1004 = vmax.f32 %v997, 0.0
    %v1005 = vmax.f32 %v999, 0.0
    %v1006 = vmax.f32 %v1001, 0.0
    %v1007 = vpack.c.bf16 %v1005, %v1003
    %v1008 = vpack.c.bf16 %v1006, %v1004
    %v1009 = vld [vmem:[%s5] sm:$0xf]
    %v1010 = vld [vmem:[%s5 + $0x4] sm:$0xf]
    %v1011 = vld [vmem:[%s5 + $0x8] sm:$0xf]
    %v1012 = vld [vmem:[%s5 + $0xc] sm:$0xf]
    %v1013 = vld [vmem:[%s5 + $0x10] sm:$0xf]
    %v1014 = vld [vmem:[%s5 + $0x14] sm:$0xf]
    %v1015 = vld [vmem:[%s5 + $0x18] sm:$0xf]
    %v1016 = vld [vmem:[%s5 + $0x1c] sm:$0xf]
    %v1017 = vld [vmem:[%s5 + $0x20] sm:$0xf]
    %v1018 = vld [vmem:[%s5 + $0x24] sm:$0xf]
    %v1019 = vld [vmem:[%s5 + $0x28] sm:$0xf]
    %v1020 = vld [vmem:[%s5 + $0x2c] sm:$0xf]
    %v1021 = vld [vmem:[%s5 + $0x30] sm:$0xf]
    %v1022 = vld [vmem:[%s5 + $0x34] sm:$0xf]
    %v1023 = vld [vmem:[%s5 + $0x38] sm:$0xf]
    %v1024 = vld [vmem:[%s5 + $0x3c] sm:$0xf]
    %v1025 = vld [vmem:[%s5 + $0x40] sm:$0xf]
    %v1026 = vld [vmem:[%s5 + $0x44] sm:$0xf]
    %v1027 = vld [vmem:[%s5 + $0x48] sm:$0xf]
    %v1028 = vld [vmem:[%s5 + $0x4c] sm:$0xf]
    %v1029 = vld [vmem:[%s6] sm:$0x1]
    %v1031 = vlaneseq
    %v1032 = vshrl.u32 %v1031, 7
    %v1033 = vsub.s32 0, %v1032
    %v1034 = vrot.slane %v1029, %v1033
    %v1056 = vunpack.c.l.b16 %v1009
    %v1057 = vunpack.c.l.b16 %v1010
    %v1058 = vunpack.c.l.b16 %v1011
    %v1059 = vunpack.c.l.b16 %v1012
    %v1060 = vunpack.c.l.b16 %v1013
    %v1061 = vunpack.c.l.b16 %v1014
    %v1062 = vunpack.c.l.b16 %v1015
    %v1063 = vunpack.c.l.b16 %v1016
    %v1064 = vunpack.c.l.b16 %v1017
    %v1065 = vunpack.c.l.b16 %v1018
    %v1066 = vunpack.c.l.b16 %v1019
    %v1067 = vunpack.c.l.b16 %v1020
    %v1068 = vunpack.c.l.b16 %v1021
    %v1069 = vunpack.c.l.b16 %v1022
    %v1070 = vunpack.c.l.b16 %v1023
    %v1071 = vunpack.c.l.b16 %v1024
    %v1072 = vunpack.c.l.b16 %v1025
    %v1073 = vunpack.c.l.b16 %v1026
    %v1074 = vunpack.c.l.b16 %v1027
    %v1075 = vunpack.c.l.b16 %v1028
    %v1076 = vpack.c.b16 %v1057, %v1056
    %v1077 = vpack.c.b16 %v1059, %v1058
    %v1078 = vpack.c.b16 %v1061, %v1060
    %v1079 = vpack.c.b16 %v1063, %v1062
    %v1080 = vpack.c.b16 %v1065, %v1064
    %v1081 = vpack.c.b16 %v1067, %v1066
    %v1082 = vpack.c.b16 %v1069, %v1068
    %v1083 = vpack.c.b16 %v1071, %v1070
    %v1084 = vpack.c.b16 %v1073, %v1072
    %v1085 = vpack.c.b16 %v1075, %v1074
    %v1097 = vsel %vm135, %v1008, 0
    %1099 = vmatprep.subr.bf16.mxu0 0
    %1100 = vmatpush1.bf16.msra.mxu0 %v1076
    %1101 = vmatprep.subr.bf16.mxu0 0
    %1102 = vmatpush1.bf16.msra.mxu0 %v1077
    %1103 = vmatprep.subr.bf16.mxu0 0
    %1104 = vmatpush1.bf16.msra.mxu0 %v1078
    %1105 = vmatprep.subr.bf16.mxu0 0
    %1106 = vmatpush1.bf16.msra.mxu0 %v1079
    %1107 = vmatprep.subr.bf16.mxu0 0
    %1108 = vmatpush1.bf16.msra.mxu0 %v1080
    %1109 = vmatprep.subr.bf16.mxu0 0
    %1110 = vmatpush1.bf16.msra.mxu0 %v1081
    %1111 = vmatprep.subr.bf16.mxu0 0
    %1112 = vmatpush1.bf16.msra.mxu0 %v1082
    %1113 = vmatprep.subr.bf16.mxu0 0
    %1114 = vmatpush1.bf16.msra.mxu0 %v1083
    %1115 = vmatprep.subr.bf16.mxu0 0
    %1116 = vmatpush1.bf16.msra.mxu0 %v1084
    %1117 = vmatprep.subr.bf16.mxu0 0
    %1118 = vmatpush1.bf16.msra.mxu0 %v1085
    %1119 = vmatprep.subr.bf16.mxu0 0
    %1120 = vmatpush1.bf16.msra.mxu0 0
    %1121 = vmatprep.subr.bf16.mxu0 0
    %1122 = vmatpush1.bf16.msra.mxu0 0
    %1123 = vmatprep.subr.bf16.mxu0 0
    %1124 = vmatpush1.bf16.msra.mxu0 0
    %1125 = vmatprep.subr.bf16.mxu0 0
    %1126 = vmatpush1.bf16.msra.mxu0 0
    %1127 = vmatprep.subr.bf16.mxu0 0
    %1128 = vmatpush1.bf16.msra.mxu0 0
    %1129 = vmatprep.subr.bf16.mxu0 0
    %1130 = vmatpush1.bf16.msra.mxu0 0
    %1131 = vmatprep.mubr.bf16.mxu0 %v1097
    %1132 = vmatmul.mubr.bf16.gmra.mrb[0].mxu0 %v1007
    %v1133 = vpop.f32.mrb[0].mxu0
    %v1134 = vadd.f32 %v1034, %v1133
    %v1135 = vpop.f32.mrb[0].mxu0
    %v1136 = vpop.f32.mrb[0].mxu0
    %v1137 = vadd.f32 %v1034, %v1136
    %v1138 = vpop.f32.mrb[0].mxu0
    %1139 = vdwg.mxu0
    %1140 = vst [vmem:[#allocation2] sm:$0xff] %v1134
    %1141 = vst [vmem:[#allocation2 + $0x8] sm:$0xff] %v1137
    // Predicated region
    $region30: #{tpu_custom_call.1} parent=1 // pred_check
      _
    $region31: #{tpu_custom_call.1} parent=1 // pred_check_branch
      %1143 = sbr.rel (0) target = $region33
    $region32: #{tpu_custom_call.1} parent=1 // pred_region
      %s1145 = ssub.s32 256, 256
      %1146 = vsyncadd [#allocation3], %s1145
      %s1147 = sshll.u32 [#allocation2], 4
      %s1148 = int_to_ptr.vmem [resolvable:$true] %s1147
      %1153 = dma.vmem_to_hbm [thread:$0]  %s1148, 256, %s7, [#allocation3], 128, 128, 8
    $region33: #{tpu_custom_call.1} parent=1 // pred_fallthru
      _
    // Predicated region
    $region34: #{tpu_custom_call.1} parent=1 // pred_check
      _
    $region35: #{tpu_custom_call.1} parent=1 // pred_check_branch
      %1155 = sbr.rel (0) target = $region37
    $region36: #{tpu_custom_call.1} parent=1 // pred_region
      %1156 = dma.done [#allocation3], 256
    $region37: #{tpu_custom_call.1} parent=1 // pred_fallthru
      _
    %1157 = vsyncpa [#allocation3], 1

</llo_original>
